<compile_context>
chip_gen: v7x
topology: tpu7x:2x2x1
jax: 0.10.0
libtpu: 0.0.40
codegen_flags: <defaults>
</compile_context>

<pallas_src>
import functools

import jax
import jax.numpy as jnp
from jax.experimental import pallas as pl
from jax.experimental.pallas import tpu as pltpu

F_IN, H1, H2, H3 = 17, 9, 4, 1


def _round_up(x, m):
    return (x + m - 1) // m * m


def bpnet_kernel(xt_ref, wa1_ref, wa2_ref, wa3_ref, o_ref, *, mxu_dtype):
    f32 = jnp.float32
    # x tile: [17, TILE_B]; cast matches torch's x.float().
    xt = xt_ref[...].astype(f32)

    # Weights with bias packed as the last column ([out, in+1]).
    w1, b1 = wa1_ref[:, :F_IN], wa1_ref[:, F_IN:]   # [9,17], [9,1]
    w2, b2 = wa2_ref[:, :H1], wa2_ref[:, H1:]       # [4, 9], [4,1]
    w3, b3 = wa3_ref[:, :H2], wa3_ref[:, H2:]       # [1, 4], [1,1]

    def dot(w, a):
        # Optionally bf16 operands (v6e/v7x MXU fast path); always f32 accum.
        return jnp.dot(w.astype(mxu_dtype), a.astype(mxu_dtype),
                       preferred_element_type=f32)

    # fc1 + relu:  [9,17] @ [17,TILE_B] -> [9,TILE_B]   (bias broadcasts over lanes)
    h1 = jnp.maximum(dot(w1, xt) + b1, 0.0)
    # fc2 + relu:  [4,9]  @ [9,TILE_B]  -> [4,TILE_B]
    h2 = jnp.maximum(dot(w2, h1) + b2, 0.0)
    # fc3:         [1,4]  @ [4,TILE_B]  -> [1,TILE_B]   (lane-dense output block)
    o_ref[...] = dot(w3, h2) + b3


def bpnet_forward_feature_major(xt, params, tile_b=32768, mxu_dtype=jnp.float32):
    """xt: [17, B] feature-major input (any float dtype). Returns [B] float32."""
    w1, b1, w2, b2, w3, b3 = params
    F, B = xt.shape

    # Pack bias as an extra column -> 3 resident constant DMAs instead of 6.
    wa1 = jnp.concatenate([w1, b1], axis=1)   # [9, 18]
    wa2 = jnp.concatenate([w2, b2], axis=1)   # [4, 10]
    wa3 = jnp.concatenate([w3, b3], axis=1)   # [1, 5]

    # Only pad truly tiny batches up to one lane group; otherwise rely on
    # Pallas' masked partial final block (no full-array pad/copy in HBM).
    b_arr = B
    if B < 128:
        xt = jnp.pad(xt, ((0, 0), (0, 128 - B)))
        b_arr = 128

    # Lane-aligned tile; cap at ~half the batch so the grid has >= 2 steps and
    # both v7x TensorCores get work on the "parallel" axis.
    half_b = _round_up(pl.cdiv(b_arr, 2), 128)
    tile_b = max(128, min(_round_up(tile_b, 128), half_b))
    num_tiles = pl.cdiv(b_arr, tile_b)

    const = lambda i: (0, 0)  # weights: resident full-array blocks
    out = pl.pallas_call(
        functools.partial(bpnet_kernel, mxu_dtype=mxu_dtype),
        out_shape=jax.ShapeDtypeStruct((1, b_arr), jnp.float32),
        grid=(num_tiles,),
        in_specs=[
            pl.BlockSpec((F, tile_b), lambda i: (0, i)),   # x: feature-major, batch-tiled
            pl.BlockSpec(wa1.shape, const),
            pl.BlockSpec(wa2.shape, const),
            pl.BlockSpec(wa3.shape, const),
        ],
        out_specs=pl.BlockSpec((1, tile_b), lambda i: (0, i)),
        compiler_params=pltpu.CompilerParams(
            dimension_semantics=("parallel",)),
    )(xt, wa1, wa2, wa3)

    # [1, b_arr] -> [B]   (matches torch's x.view(x.shape[0]))
    return out.reshape(b_arr)[:B]


def bpnet_forward(x, params, tile_b=32768, mxu_dtype=jnp.float32):
    """x: [B, 17] (PyTorch layout). Returns [B] float32 (== BPNet.forward).

    Note: the transpose to feature-major costs one extra HBM pass; callers
    that can produce x as [17, B] should use bpnet_forward_feature_major.
    """
    return bpnet_forward_feature_major(x.T, params, tile_b=tile_b,
                                       mxu_dtype=mxu_dtype)


def init_params(key):
    """PyTorch nn.Linear default init: U(-1/sqrt(fan_in), +1/sqrt(fan_in)).
    Weights kept in PyTorch layout [out, in]; biases stored as [out, 1]."""
    dims = [(F_IN, H1), (H1, H2), (H2, H3)]
    params = []
    keys = jax.random.split(key, 2 * len(dims))
    for i, (fan_in, fan_out) in enumerate(dims):
        bound = 1.0 / (fan_in ** 0.5)
        w = jax.random.uniform(
            keys[2 * i], (fan_out, fan_in), jnp.float32, -bound, bound)
        b = jax.random.uniform(
            keys[2 * i + 1], (fan_out, 1), jnp.float32, -bound, bound)
        params += [w, b]
    return tuple(params)


def bpnet_reference(x, params):
    w1, b1, w2, b2, w3, b3 = params
    hp = jax.lax.Precision.HIGHEST
    xf = x.astype(jnp.float32)
    h = jnp.maximum(jnp.dot(xf, w1.T, precision=hp) + b1[:, 0], 0.0)
    h = jnp.maximum(jnp.dot(h, w2.T, precision=hp) + b2[:, 0], 0.0)
    o = jnp.dot(h, w3.T, precision=hp) + b3[:, 0]
    return o.reshape(x.shape[0])


if __name__ == "__main__":
    key = jax.random.PRNGKey(0)
    k_x, k_p = jax.random.split(key)
    params = init_params(k_p)

    # Small primary check (B=8): single tile (tiny-batch pad path).
    B = 8
    x = jax.random.normal(k_x, (B, F_IN), jnp.float32)
    y = bpnet_forward(x, params)
    jax.block_until_ready(y)
    y_ref = bpnet_reference(x, params)
    assert y.shape == (B,)
    assert jnp.allclose(y, y_ref, atol=1e-4, rtol=1e-4)

    # Multi-tile + masked partial final block (B=300, tile_b=128 -> 3 steps).
    B2 = 300
    x2 = jax.random.normal(k_x, (B2, F_IN), jnp.float32)
    y2 = bpnet_forward(x2, params, tile_b=128)
    jax.block_until_ready(y2)
    y2_ref = bpnet_reference(x2, params)
    assert y2.shape == (B2,)
    assert jnp.allclose(y2, y2_ref, atol=1e-4, rtol=1e-4)

    # Default big-tile path with the >=2-tile cap (B=1000 -> tile_b=512, 2 steps).
    B3 = 1000
    x3 = jax.random.normal(k_x, (B3, F_IN), jnp.float32)
    y3 = bpnet_forward(x3, params)
    jax.block_until_ready(y3)
    y3_ref = bpnet_reference(x3, params)
    assert y3.shape == (B3,)
    assert jnp.allclose(y3, y3_ref, atol=1e-4, rtol=1e-4)

    # Optional bf16-operand MXU mode (v6e/v7x throughput path); K<=17 keeps the
    # rounding error small, validated at a looser tolerance.
    y3_bf16 = bpnet_forward(x3, params, mxu_dtype=jnp.bfloat16)
    jax.block_until_ready(y3_bf16)
    assert jnp.allclose(y3_bf16, y3_ref, atol=5e-2, rtol=5e-2)

    print("KERNEL_OK")
</pallas_src>

<mosaic_0001>
module attributes {stable_mosaic.version = 11 : i64} {
  func.func @bpnet_kernel(%arg0: i32, %arg1: memref<17x128xf32, #tpu.memory_space<vmem>>, %arg2: memref<9x18xf32, #tpu.memory_space<vmem>>, %arg3: memref<4x10xf32, #tpu.memory_space<vmem>>, %arg4: memref<1x5xf32, #tpu.memory_space<vmem>>, %arg5: memref<1x128xf32, #tpu.memory_space<vmem>>) attributes {dimension_semantics = [#tpu.dimension_semantics<parallel>], iteration_bounds = array<i64: 1>, scalar_prefetch = 0 : i64, scratch_operands = 0 : i64, tpu.core_type = #tpu.core_type<tc>, window_params = [{transform_indices = @transform_0, window_bounds = array<i64: 17, 128>}, {pipeline_mode = #tpu.pipeline_mode<synchronous>, transform_indices = @transform_1, window_bounds = array<i64: 9, 18>}, {pipeline_mode = #tpu.pipeline_mode<synchronous>, transform_indices = @transform_2, window_bounds = array<i64: 4, 10>}, {pipeline_mode = #tpu.pipeline_mode<synchronous>, transform_indices = @transform_3, window_bounds = array<i64: 1, 5>}, {transform_indices = @transform_4, window_bounds = array<i64: 1, 128>}]} {
    %c0 = arith.constant 0 : index
    %c0_0 = arith.constant 0 : index
    %0 = vector.load %arg1[%c0, %c0_0] : memref<17x128xf32, #tpu.memory_space<vmem>>, vector<17x128xf32>
    %c0_1 = arith.constant 0 : index
    %c0_2 = arith.constant 0 : index
    %1 = vector.load %arg2[%c0_1, %c0_2] : memref<9x18xf32, #tpu.memory_space<vmem>>, vector<9x17xf32>
    %c0_3 = arith.constant 0 : index
    %c17 = arith.constant 17 : index
    %2 = vector.load %arg2[%c0_3, %c17] : memref<9x18xf32, #tpu.memory_space<vmem>>, vector<9x1xf32>
    %c0_4 = arith.constant 0 : index
    %c0_5 = arith.constant 0 : index
    %3 = vector.load %arg3[%c0_4, %c0_5] : memref<4x10xf32, #tpu.memory_space<vmem>>, vector<4x9xf32>
    %c0_6 = arith.constant 0 : index
    %c9 = arith.constant 9 : index
    %4 = vector.load %arg3[%c0_6, %c9] : memref<4x10xf32, #tpu.memory_space<vmem>>, vector<4x1xf32>
    %c0_7 = arith.constant 0 : index
    %c0_8 = arith.constant 0 : index
    %5 = vector.load %arg4[%c0_7, %c0_8] : memref<1x5xf32, #tpu.memory_space<vmem>>, vector<1x4xf32>
    %c0_9 = arith.constant 0 : index
    %c4 = arith.constant 4 : index
    %6 = vector.load %arg4[%c0_9, %c4] : memref<1x5xf32, #tpu.memory_space<vmem>>, vector<1x1xf32>
    %cst = arith.constant dense<0.000000e+00> : vector<9x128xf32>
    %7 = tpu.matmul %1, %0, %cst {dimension_numbers = #tpu.dot_dimension_numbers<[1], [0], [0], [1], [0, 0, 1, 1], [], []>} : vector<9x17xf32>, vector<17x128xf32>, vector<9x128xf32> -> vector<9x128xf32>
    %8 = vector.broadcast %2 : vector<9x1xf32> to vector<9x128xf32>
    %9 = arith.addf %7, %8 : vector<9x128xf32>
    %cst_10 = arith.constant 0.000000e+00 : f32
    %10 = vector.broadcast %cst_10 : f32 to vector<9x128xf32>
    %11 = arith.maximumf %9, %10 : vector<9x128xf32>
    %cst_11 = arith.constant dense<0.000000e+00> : vector<4x128xf32>
    %12 = tpu.matmul %3, %11, %cst_11 {dimension_numbers = #tpu.dot_dimension_numbers<[1], [0], [0], [1], [0, 0, 1, 1], [], []>} : vector<4x9xf32>, vector<9x128xf32>, vector<4x128xf32> -> vector<4x128xf32>
    %13 = vector.broadcast %4 : vector<4x1xf32> to vector<4x128xf32>
    %14 = arith.addf %12, %13 : vector<4x128xf32>
    %cst_12 = arith.constant 0.000000e+00 : f32
    %15 = vector.broadcast %cst_12 : f32 to vector<4x128xf32>
    %16 = arith.maximumf %14, %15 : vector<4x128xf32>
    %cst_13 = arith.constant dense<0.000000e+00> : vector<1x128xf32>
    %17 = tpu.matmul %5, %16, %cst_13 {dimension_numbers = #tpu.dot_dimension_numbers<[1], [0], [0], [1], [0, 0, 1, 1], [], []>} : vector<1x4xf32>, vector<4x128xf32>, vector<1x128xf32> -> vector<1x128xf32>
    %18 = vector.broadcast %6 : vector<1x1xf32> to vector<1x128xf32>
    %19 = arith.addf %17, %18 : vector<1x128xf32>
    %c0_14 = arith.constant 0 : index
    %c0_15 = arith.constant 0 : index
    %20 = vector.load %arg5[%c0_14, %c0_15] : memref<1x128xf32, #tpu.memory_space<vmem>>, vector<1x128xf32>
    tpu.vector_store %arg5[%c0_14, %c0_15], %19 {strides = array<i32>} : memref<1x128xf32, #tpu.memory_space<vmem>>, vector<1x128xf32>,
    return
  }
  func.func @transform_0(%arg0: i32) -> (i32, i32) {
    %c0_i32 = arith.constant 0 : i32
    %c0_i32_0 = arith.constant 0 : i32
    return %c0_i32, %arg0 : i32, i32
  }
  func.func @transform_1(%arg0: i32) -> (i32, i32) {
    %c0_i32 = arith.constant 0 : i32
    %c0_i32_0 = arith.constant 0 : i32
    %c0_i32_1 = arith.constant 0 : i32
    return %c0_i32, %c0_i32_0 : i32, i32
  }
  func.func @transform_2(%arg0: i32) -> (i32, i32) {
    %c0_i32 = arith.constant 0 : i32
    %c0_i32_0 = arith.constant 0 : i32
    %c0_i32_1 = arith.constant 0 : i32
    return %c0_i32, %c0_i32_0 : i32, i32
  }
  func.func @transform_3(%arg0: i32) -> (i32, i32) {
    %c0_i32 = arith.constant 0 : i32
    %c0_i32_0 = arith.constant 0 : i32
    %c0_i32_1 = arith.constant 0 : i32
    return %c0_i32, %c0_i32_0 : i32, i32
  }
  func.func @transform_4(%arg0: i32) -> (i32, i32) {
    %c0_i32 = arith.constant 0 : i32
    %c0_i32_0 = arith.constant 0 : i32
    return %c0_i32, %arg0 : i32, i32
  }
}

</mosaic_0001>

<llo_original>
// kernel: tpu_custom_call.1
$region0: #{tpu_custom_call.1}
  #allocation0 [shape = 'u32[]', space=smem, size = 0x4, offset = 0x4, fixed_abs, tag = 'smem constant byte address 0x4 - core index']
  #allocation1 [shape = 'u32[144,128]{1,0:T(1,128)}', space=vmem, size = 0x12000, scoped, tag = 'internal scratch']
  %s0 = inlined_call_operand.hbm [shape: f32[17,128], index: 0, kind: input, shape index: {}]
  %s1 = inlined_call_operand.hbm [shape: f32[9,18], index: 1, kind: input, shape index: {}]
  %s2 = inlined_call_operand.vmem [shape: f32[4,10], index: 2, kind: input, shape index: {}]
  %s3 = inlined_call_operand.vmem [shape: f32[1,5], index: 3, kind: input, shape index: {}]
  %s4 = inlined_call_operand.hbm [shape: f32[1,128], index: 4, kind: output, shape index: {}]
  %s5 = sld [smem:[#allocation0]]
  $region34: #{tpu_custom_call.1} parent=0
    _
  %s7 = ssub.s32 1, %s5
  %s8 = scalar_select 0, %s7, %s5
  $region1: #{tpu_custom_call.1} parent=0
    #allocation2 [shape = 'u8[12288]{0}', space=vmem, size = 0x3000, scoped, tag = 'input window, operand 0, single buffered']
    #allocation3 [shape = 's32[1]{0}', space=sflag, size = 0x4, scoped, tag = 'scoped memory for tpu_custom_call.1']
    #allocation4 [shape = 's32[1]{0}', space=sflag, size = 0x4, scoped, tag = 'scoped memory for tpu_custom_call.1']
    #allocation5 [shape = 'u8[8192]{0}', space=vmem, size = 0x2000, scoped, tag = 'input window, operand 1, single buffered']
    #allocation6 [shape = 's32[1]{0}', space=sflag, size = 0x4, scoped, tag = 'scoped memory for tpu_custom_call.1']
    #allocation7 [shape = 'u8[512]{0}', space=vmem, size = 0x400, scoped, tag = 'output window, operand 0, single buffered']
    %9 = vsyncpa [#allocation3], 0
    %10 = vsyncpa [#allocation6], 0
    %11 = vsyncpa [#allocation4], 0
    // Predicated region
    $region2: #{tpu_custom_call.1} parent=1 // pred_check
      _
    $region3: #{tpu_custom_call.1} parent=1 // pred_check_branch
      %13 = sbr.rel (0) target = $region5
    $region4: #{tpu_custom_call.1} parent=1 // pred_region
      %s15 = ssub.s32 384, 384
      %16 = vsyncadd [#allocation3], %s15
      %s17 = sshll.u32 [#allocation2], 4
      %s18 = int_to_ptr.vmem [resolvable:$true] %s17
      %23 = dma.hbm_to_vmem [thread:$0]  %s0, 384, %s18, [#allocation3], 128, 128, 8
    $region5: #{tpu_custom_call.1} parent=1 // pred_fallthru
      _
    // Predicated region
    $region6: #{tpu_custom_call.1} parent=1 // pred_check
      _
    $region7: #{tpu_custom_call.1} parent=1 // pred_check_branch
      %25 = sbr.rel (0) target = $region9
    $region8: #{tpu_custom_call.1} parent=1 // pred_region
      %s27 = ssub.s32 256, 256
      %28 = vsyncadd [#allocation6], %s27
      %s29 = sshll.u32 [#allocation5], 4
      %s30 = int_to_ptr.vmem [resolvable:$true] %s29
      %35 = dma.hbm_to_vmem [thread:$0]  %s1, 256, %s30, [#allocation6], 128, 128, 8
    $region9: #{tpu_custom_call.1} parent=1 // pred_fallthru
      _
    // Predicated region
    $region10: #{tpu_custom_call.1} parent=1 // pred_check
      _
    $region11: #{tpu_custom_call.1} parent=1 // pred_check_branch
      %37 = sbr.rel (0) target = $region13
    $region12: #{tpu_custom_call.1} parent=1 // pred_region
      _
    $region13: #{tpu_custom_call.1} parent=1 // pred_fallthru
      _
    // Predicated region
    $region14: #{tpu_custom_call.1} parent=1 // pred_check
      _
    $region15: #{tpu_custom_call.1} parent=1 // pred_check_branch
      %39 = sbr.rel (0) target = $region17
    $region16: #{tpu_custom_call.1} parent=1 // pred_region
      _
    $region17: #{tpu_custom_call.1} parent=1 // pred_fallthru
      _
    // Predicated region
    $region18: #{tpu_custom_call.1} parent=1 // pred_check
      _
    $region19: #{tpu_custom_call.1} parent=1 // pred_check_branch
      %41 = sbr.rel (0) target = $region21
    $region20: #{tpu_custom_call.1} parent=1 // pred_region
      %42 = dma.done [#allocation3], 384
    $region21: #{tpu_custom_call.1} parent=1 // pred_fallthru
      _
    // Predicated region
    $region22: #{tpu_custom_call.1} parent=1 // pred_check
      _
    $region23: #{tpu_custom_call.1} parent=1 // pred_check_branch
      %44 = sbr.rel (0) target = $region25
    $region24: #{tpu_custom_call.1} parent=1 // pred_region
      %45 = dma.done [#allocation6], 256
    $region25: #{tpu_custom_call.1} parent=1 // pred_fallthru
      _
    %v46 = vld [vmem:[#allocation2] sm:$0xff]
    %v47 = vld [vmem:[#allocation2 + $0x8] sm:$0xff]
    %v48 = vld [vmem:[#allocation2 + $0x10] sm:$0x1]
    %v49 = vld [vmem:[#allocation5] sm:$0xff]
    %v50 = vld [vmem:[#allocation5 + $0x8] sm:$0x1]
    %v51 = vld [vmem:[%s2] sm:$0xf]
    %v52 = vld [vmem:[%s3] sm:$0x1]
    %54 = vset.pattern.permute.xlu0 17
    %55 = vperm.xlu0 %54, %v49
    %v56 = vpop.permute.xlu0 %55
    %59 = vset.pattern.permute.xlu0 17
    %60 = vperm.xlu0 %59, %v50
    %v61 = vpop.permute.xlu0 %60
    %vm63 = vcmask 138240
    %v64 = vsel %vm63, %v49, 0
    %v66 = vsel %vm63, %v50, 0
    %vm68 = vcmask 1040384
    %v70 = vsel %vm68, %v48, 0
    %72 = vmatprep.subr.mxu0 0.0
    %73 = vmatpush1.msra.mxu0 %v46
    %74 = vmatprep.subr.mxu0 0.0
    %75 = vmatpush1.msra.mxu0 %v47
    %76 = vmatprep.subr.mxu0 0.0
    %77 = vmatpush1.msra.mxu0 %v70
    %78 = vmatprep.subr.mxu0 0.0
    %79 = vmatpush1.msra.mxu0 0.0
    %80 = vmatprep.subr.mxu0 0.0
    %81 = vmatpush1.msra.mxu0 0.0
    %82 = vmatprep.subr.mxu0 0.0
    %83 = vmatpush1.msra.mxu0 0.0
    %84 = vmatprep.subr.mxu0 0.0
    %85 = vmatpush1.msra.mxu0 0.0
    %86 = vmatprep.subr.mxu0 0.0
    %87 = vmatpush1.msra.mxu0 0.0
    %88 = vmatprep.subr.mxu0 0.0
    %89 = vmatpush1.msra.mxu0 0.0
    %90 = vmatprep.subr.mxu0 0.0
    %91 = vmatpush1.msra.mxu0 0.0
    %92 = vmatprep.subr.mxu0 0.0
    %93 = vmatpush1.msra.mxu0 0.0
    %94 = vmatprep.subr.mxu0 0.0
    %95 = vmatpush1.msra.mxu0 0.0
    %96 = vmatprep.subr.mxu0 0.0
    %97 = vmatpush1.msra.mxu0 0.0
    %98 = vmatprep.subr.mxu0 0.0
    %99 = vmatpush1.msra.mxu0 0.0
    %100 = vmatprep.subr.mxu0 0.0
    %101 = vmatpush1.msra.mxu0 0.0
    %102 = vmatprep.subr.mxu0 0.0
    %103 = vmatpush1.msra.mxu0 0.0
    %104 = vmatprep.subr.mxu0 0.0
    %105 = vmatpush1.msra.mxu0 0.0
    %106 = vmatprep.subr.mxu0 0.0
    %107 = vmatpush1.msra.mxu0 0.0
    %108 = vmatprep.subr.mxu0 0.0
    %109 = vmatpush1.msra.mxu0 0.0
    %110 = vmatprep.subr.mxu0 0.0
    %111 = vmatpush1.msra.mxu0 0.0
    %112 = vmatprep.subr.mxu0 0.0
    %113 = vmatpush1.msra.mxu0 0.0
    %114 = vmatprep.subr.mxu0 0.0
    %115 = vmatpush1.msra.mxu0 0.0
    %116 = vmatprep.subr.mxu0 0.0
    %117 = vmatpush1.msra.mxu0 0.0
    %118 = vmatprep.subr.mxu0 0.0
    %119 = vmatpush1.msra.mxu0 0.0
    %120 = vmatprep.subr.mxu0 0.0
    %121 = vmatpush1.msra.mxu0 0.0
    %122 = vmatprep.subr.mxu0 0.0
    %123 = vmatpush1.msra.mxu0 0.0
    %124 = vmatprep.subr.mxu0 0.0
    %125 = vmatpush1.msra.mxu0 0.0
    %126 = vmatprep.subr.mxu0 0.0
    %127 = vmatpush1.msra.mxu0 0.0
    %128 = vmatprep.subr.mxu0 0.0
    %129 = vmatpush1.msra.mxu0 0.0
    %130 = vmatprep.subr.mxu0 0.0
    %131 = vmatpush1.msra.mxu0 0.0
    %132 = vmatprep.subr.mxu0 0.0
    %133 = vmatpush1.msra.mxu0 0.0
    %134 = vmatprep.subr.mxu0 0.0
    %135 = vmatpush1.msra.mxu0 0.0
    %136 = vmatprep.mubr.f32.mxu0 0.0
    %137 = vmatmul.mubr.f32.gmra.mrb[0].mxu0 %v64
    %v138 = vpop.f32.mrb[0].mxu0
    %v139 = vadd.f32 %v56, %v138
    %v140 = vpop.f32.mrb[0].mxu0
    %141 = vmatprep.mubr.f32.mxu0 0.0
    %142 = vmatmul.mubr.f32.gmra.mrb[0].mxu0 %v66
    %v143 = vpop.f32.mrb[0].mxu0
    %v144 = vadd.f32 %v61, %v143
    %v145 = vpop.f32.mrb[0].mxu0
    %146 = vdwg.mxu0
    %v147 = vmax.f32 %v139, 0.0
    %v148 = vmax.f32 %v144, 0.0
    %150 = vset.pattern.permute.xlu0 9
    %151 = vperm.xlu0 %150, %v51
    %v152 = vpop.permute.xlu0 %151
    %vm154 = vcmask 72704
    %v155 = vsel %vm154, %v51, 0
    %v158 = vsel %vm68, %v148, 0
    %160 = vmatprep.subr.mxu0 0.0
    %161 = vmatpush1.msra.mxu0 %v147
    %162 = vmatprep.subr.mxu0 0.0
    %163 = vmatpush1.msra.mxu0 %v158
    %164 = vmatprep.subr.mxu0 0.0
    %165 = vmatpush1.msra.mxu0 0.0
    %166 = vmatprep.subr.mxu0 0.0
    %167 = vmatpush1.msra.mxu0 0.0
    %168 = vmatprep.subr.mxu0 0.0
    %169 = vmatpush1.msra.mxu0 0.0
    %170 = vmatprep.subr.mxu0 0.0
    %171 = vmatpush1.msra.mxu0 0.0
    %172 = vmatprep.subr.mxu0 0.0
    %173 = vmatpush1.msra.mxu0 0.0
    %174 = vmatprep.subr.mxu0 0.0
    %175 = vmatpush1.msra.mxu0 0.0
    %176 = vmatprep.subr.mxu0 0.0
    %177 = vmatpush1.msra.mxu0 0.0
    %178 = vmatprep.subr.mxu0 0.0
    %179 = vmatpush1.msra.mxu0 0.0
    %180 = vmatprep.subr.mxu0 0.0
    %181 = vmatpush1.msra.mxu0 0.0
    %182 = vmatprep.subr.mxu0 0.0
    %183 = vmatpush1.msra.mxu0 0.0
    %184 = vmatprep.subr.mxu0 0.0
    %185 = vmatpush1.msra.mxu0 0.0
    %186 = vmatprep.subr.mxu0 0.0
    %187 = vmatpush1.msra.mxu0 0.0
    %188 = vmatprep.subr.mxu0 0.0
    %189 = vmatpush1.msra.mxu0 0.0
    %190 = vmatprep.subr.mxu0 0.0
    %191 = vmatpush1.msra.mxu0 0.0
    %192 = vmatprep.subr.mxu0 0.0
    %193 = vmatpush1.msra.mxu0 0.0
    %194 = vmatprep.subr.mxu0 0.0
    %195 = vmatpush1.msra.mxu0 0.0
    %196 = vmatprep.subr.mxu0 0.0
    %197 = vmatpush1.msra.mxu0 0.0
    %198 = vmatprep.subr.mxu0 0.0
    %199 = vmatpush1.msra.mxu0 0.0
    %200 = vmatprep.subr.mxu0 0.0
    %201 = vmatpush1.msra.mxu0 0.0
    %202 = vmatprep.subr.mxu0 0.0
    %203 = vmatpush1.msra.mxu0 0.0
    %204 = vmatprep.subr.mxu0 0.0
    %205 = vmatpush1.msra.mxu0 0.0
    %206 = vmatprep.subr.mxu0 0.0
    %207 = vmatpush1.msra.mxu0 0.0
    %208 = vmatprep.subr.mxu0 0.0
    %209 = vmatpush1.msra.mxu0 0.0
    %210 = vmatprep.subr.mxu0 0.0
    %211 = vmatpush1.msra.mxu0 0.0
    %212 = vmatprep.subr.mxu0 0.0
    %213 = vmatpush1.msra.mxu0 0.0
    %214 = vmatprep.subr.mxu0 0.0
    %215 = vmatpush1.msra.mxu0 0.0
    %216 = vmatprep.subr.mxu0 0.0
    %217 = vmatpush1.msra.mxu0 0.0
    %218 = vmatprep.subr.mxu0 0.0
    %219 = vmatpush1.msra.mxu0 0.0
    %220 = vmatprep.subr.mxu0 0.0
    %221 = vmatpush1.msra.mxu0 0.0
    %222 = vmatprep.subr.mxu0 0.0
    %223 = vmatpush1.msra.mxu0 0.0
    %224 = vmatprep.mubr.f32.mxu0 0.0
    %225 = vmatmul.mubr.f32.gmra.mrb[0].mxu0 %v155
    %v226 = vpop.f32.mrb[0].mxu0
    %v227 = vadd.f32 %v152, %v226
    %v228 = vpop.f32.mrb[0].mxu0
    %229 = vdwg.mxu0
    %v230 = vmax.f32 %v227, 0.0
    %232 = vset.pattern.permute.xlu0 4
    %233 = vperm.xlu0 %232, %v52
    %v234 = vpop.permute.xlu0 %233
    %v236 = vlaneseq
    %v237 = vshrl.u32 %v236, 7
    %v238 = vsub.s32 0, %v237
    %v239 = vrot.slane %v234, %v238
    %vm240 = vcmask 31744
    %v241 = vsel %vm240, %v52, 0
    %vm243 = vcmask 1043456
    %v245 = vsel %vm243, %v230, 0
    %247 = vmatprep.subr.mxu0 0.0
    %248 = vmatpush1.msra.mxu0 %v245
    %249 = vmatprep.subr.mxu0 0.0
    %250 = vmatpush1.msra.mxu0 0.0
    %251 = vmatprep.subr.mxu0 0.0
    %252 = vmatpush1.msra.mxu0 0.0
    %253 = vmatprep.subr.mxu0 0.0
    %254 = vmatpush1.msra.mxu0 0.0
    %255 = vmatprep.subr.mxu0 0.0
    %256 = vmatpush1.msra.mxu0 0.0
    %257 = vmatprep.subr.mxu0 0.0
    %258 = vmatpush1.msra.mxu0 0.0
    %259 = vmatprep.subr.mxu0 0.0
    %260 = vmatpush1.msra.mxu0 0.0
    %261 = vmatprep.subr.mxu0 0.0
    %262 = vmatpush1.msra.mxu0 0.0
    %263 = vmatprep.subr.mxu0 0.0
    %264 = vmatpush1.msra.mxu0 0.0
    %265 = vmatprep.subr.mxu0 0.0
    %266 = vmatpush1.msra.mxu0 0.0
    %267 = vmatprep.subr.mxu0 0.0
    %268 = vmatpush1.msra.mxu0 0.0
    %269 = vmatprep.subr.mxu0 0.0
    %270 = vmatpush1.msra.mxu0 0.0
    %271 = vmatprep.subr.mxu0 0.0
    %272 = vmatpush1.msra.mxu0 0.0
    %273 = vmatprep.subr.mxu0 0.0
    %274 = vmatpush1.msra.mxu0 0.0
    %275 = vmatprep.subr.mxu0 0.0
    %276 = vmatpush1.msra.mxu0 0.0
    %277 = vmatprep.subr.mxu0 0.0
    %278 = vmatpush1.msra.mxu0 0.0
    %279 = vmatprep.subr.mxu0 0.0
    %280 = vmatpush1.msra.mxu0 0.0
    %281 = vmatprep.subr.mxu0 0.0
    %282 = vmatpush1.msra.mxu0 0.0
    %283 = vmatprep.subr.mxu0 0.0
    %284 = vmatpush1.msra.mxu0 0.0
    %285 = vmatprep.subr.mxu0 0.0
    %286 = vmatpush1.msra.mxu0 0.0
    %287 = vmatprep.subr.mxu0 0.0
    %288 = vmatpush1.msra.mxu0 0.0
    %289 = vmatprep.subr.mxu0 0.0
    %290 = vmatpush1.msra.mxu0 0.0
    %291 = vmatprep.subr.mxu0 0.0
    %292 = vmatpush1.msra.mxu0 0.0
    %293 = vmatprep.subr.mxu0 0.0
    %294 = vmatpush1.msra.mxu0 0.0
    %295 = vmatprep.subr.mxu0 0.0
    %296 = vmatpush1.msra.mxu0 0.0
    %297 = vmatprep.subr.mxu0 0.0
    %298 = vmatpush1.msra.mxu0 0.0
    %299 = vmatprep.subr.mxu0 0.0
    %300 = vmatpush1.msra.mxu0 0.0
    %301 = vmatprep.subr.mxu0 0.0
    %302 = vmatpush1.msra.mxu0 0.0
    %303 = vmatprep.subr.mxu0 0.0
    %304 = vmatpush1.msra.mxu0 0.0
    %305 = vmatprep.subr.mxu0 0.0
    %306 = vmatpush1.msra.mxu0 0.0
    %307 = vmatprep.subr.mxu0 0.0
    %308 = vmatpush1.msra.mxu0 0.0
    %309 = vmatprep.subr.mxu0 0.0
    %310 = vmatpush1.msra.mxu0 0.0
    %311 = vmatprep.mubr.f32.mxu0 0.0
    %312 = vmatmul.mubr.f32.gmra.mrb[0].mxu0 %v241
    %v313 = vpop.f32.mrb[0].mxu0
    %v314 = vadd.f32 %v239, %v313
    %v315 = vpop.f32.mrb[0].mxu0
    %316 = vdwg.mxu0
    %317 = vst [vmem:[#allocation7] sm:$0x1] %v314
    // Predicated region
    $region26: #{tpu_custom_call.1} parent=1 // pred_check
      _
    $region27: #{tpu_custom_call.1} parent=1 // pred_check_branch
      %319 = sbr.rel (0) target = $region29
    $region28: #{tpu_custom_call.1} parent=1 // pred_region
      %s321 = ssub.s32 16, 16
      %322 = vsyncadd [#allocation4], %s321
      %s324 = sshll.u32 [#allocation7], 4
      %s325 = int_to_ptr.vmem [resolvable:$true] %s324
      %327 = dma.vmem_to_hbm [thread:$0]  %s325, 16, %s4, [#allocation4]
    $region29: #{tpu_custom_call.1} parent=1 // pred_fallthru
      _
    // Predicated region
    $region30: #{tpu_custom_call.1} parent=1 // pred_check
      _
    $region31: #{tpu_custom_call.1} parent=1 // pred_check_branch
      %329 = sbr.rel (0) target = $region33
    $region32: #{tpu_custom_call.1} parent=1 // pred_region
      %330 = dma.done [#allocation4], 16
    $region33: #{tpu_custom_call.1} parent=1 // pred_fallthru
      _
    %331 = vsyncpa [#allocation3], 1
    %332 = vsyncpa [#allocation6], 1
    %333 = vsyncpa [#allocation4], 1

</llo_original>
